<compile_context>
chip_gen: v5e
topology: v5e:2x2
jax: 0.10.0
libtpu: 0.0.40
codegen_flags: <defaults>
</compile_context>

<pallas_src>
import jax
import jax.numpy as jnp
from jax.experimental import pallas as pl
from jax.experimental.pallas import tpu as pltpu

GEN_NEGSLOPE = 0.1


def _round_up(x, m):
    return ((x + m - 1) // m) * m


def generator_kernel(x_ref, w1_ref, b1_ref, w2_ref, b2_ref, out_ref):
    # ---- Linear 1 (MXU, f32 accumulation) ----
    h = jnp.dot(x_ref[...], w1_ref[...], preferred_element_type=jnp.float32)
    h = h + b1_ref[...]                       # (1, H) broadcasts over rows, f32
    # ---- LeakyReLU(0.1): slope < 1  =>  max(h, 0.1*h) == leaky_relu(h) ----
    h = jnp.maximum(h, GEN_NEGSLOPE * h)
    # ---- Linear 2 (MXU, f32 accumulation) ----
    y = jnp.dot(h.astype(w2_ref.dtype), w2_ref[...],
                preferred_element_type=jnp.float32)
    y = y + b2_ref[...]
    # ---- Tanh (EUP) + lane-dense store ----
    out_ref[...] = jnp.tanh(y).astype(out_ref.dtype)


def _generator_forward_impl(x, w1, b1, w2, b2, *, block_m, mxu_dtype):
    """x: (B, in_features) f32. Weights pre-transposed to (in, out) layout."""
    B, in_f = x.shape
    hid = w1.shape[1]
    out_f = w2.shape[1]
    f32 = jnp.float32

    # Pad feature dims to 128 lanes (lane-dense stores, full MXU K) and the
    # batch to a sublane/MXU-friendly block_m.
    in_p = _round_up(in_f, 128)
    hid_p = _round_up(hid, 128)
    out_p = _round_up(out_f, 128)
    bm = min(block_m, _round_up(B, 8))
    B_p = _round_up(B, bm)

    # Zero-padded operands (zeros are exact for linear layers; tanh(0)=0 cols
    # are sliced off below).  MXU inputs optionally cast to bf16, biases f32.
    x_p = jnp.zeros((B_p, in_p), mxu_dtype).at[:B, :in_f].set(x.astype(mxu_dtype))
    w1_p = jnp.zeros((in_p, hid_p), mxu_dtype).at[:in_f, :hid].set(w1.astype(mxu_dtype))
    b1_p = jnp.zeros((1, hid_p), f32).at[:, :hid].set(b1.astype(f32).reshape(1, -1))
    w2_p = jnp.zeros((hid_p, out_p), mxu_dtype).at[:hid, :out_f].set(w2.astype(mxu_dtype))
    b2_p = jnp.zeros((1, out_p), f32).at[:, :out_f].set(b2.astype(f32).reshape(1, -1))

    grid = (B_p // bm,)

    # Cost hint for XLA scheduling around the custom call.
    flops = 2 * B_p * (in_p * hid_p + hid_p * out_p)
    transcendentals = B_p * out_p
    mxu_size = jnp.dtype(mxu_dtype).itemsize
    bytes_accessed = (
        B_p * in_p * mxu_size
        + (in_p * hid_p + hid_p * out_p) * mxu_size
        + (hid_p + out_p) * 4
        + B_p * out_p * 4
    )

    # VMEM budget: double-buffered x/out tiles + resident weights + activations.
    vmem_est = (
        2 * bm * in_p * mxu_size
        + 2 * bm * out_p * 4
        + 2 * (in_p * hid_p + hid_p * out_p) * mxu_size
        + 2 * (hid_p + out_p) * 4
        + 2 * bm * hid_p * 4
    )
    vmem_limit = int(min(max(2 * vmem_est, 32 << 20), 64 << 20))  # v7x-safe cap

    out_padded = pl.pallas_call(
        generator_kernel,
        out_shape=jax.ShapeDtypeStruct((B_p, out_p), f32),
        grid=grid,
        in_specs=[
            pl.BlockSpec((bm, in_p), lambda i: (i, 0)),       # x: tiled over batch
            pl.BlockSpec((in_p, hid_p), lambda i: (0, 0)),    # w1: VMEM-resident
            pl.BlockSpec((1, hid_p), lambda i: (0, 0)),       # b1: VMEM-resident
            pl.BlockSpec((hid_p, out_p), lambda i: (0, 0)),   # w2: VMEM-resident
            pl.BlockSpec((1, out_p), lambda i: (0, 0)),       # b2: VMEM-resident
        ],
        out_specs=pl.BlockSpec((bm, out_p), lambda i: (i, 0)),
        compiler_params=pltpu.CompilerParams(
            dimension_semantics=("parallel",),   # shard batch grid across TCs (v7x)
            vmem_limit_bytes=vmem_limit,
        ),
        cost_estimate=pl.CostEstimate(
            flops=flops,
            transcendentals=transcendentals,
            bytes_accessed=bytes_accessed,
        ),
    )(x_p, w1_p, b1_p, w2_p, b2_p)

    return out_padded[:B, :out_f]


generator_forward = jax.jit(
    _generator_forward_impl, static_argnames=("block_m", "mxu_dtype")
)


def init_params(key, in_features, hidden_features, out_features):
    """Deterministic init mimicking nn.Linear's uniform(-1/sqrt(fan_in), 1/sqrt(fan_in)).
    Weights stored as (in, out) — i.e. transpose of PyTorch's (out, in)."""
    k1, k2, k3, k4 = jax.random.split(key, 4)
    lim1 = 1.0 / jnp.sqrt(in_features)
    lim2 = 1.0 / jnp.sqrt(hidden_features)
    w1 = jax.random.uniform(k1, (in_features, hidden_features), jnp.float32, -lim1, lim1)
    b1 = jax.random.uniform(k2, (1, hidden_features), jnp.float32, -lim1, lim1)
    w2 = jax.random.uniform(k3, (hidden_features, out_features), jnp.float32, -lim2, lim2)
    b2 = jax.random.uniform(k4, (1, out_features), jnp.float32, -lim2, lim2)
    return w1, b1, w2, b2


if __name__ == "__main__":
    # Shapes consistent with the MLP generator forward; batch sized so the
    # grid actually tiles (block_m=256 -> 2 grid steps).
    batch, in_features, hidden_features, out_features = 512, 64, 128, 64

    key = jax.random.PRNGKey(0)
    kx, kp = jax.random.split(key)
    x = jax.random.normal(kx, (batch, in_features), jnp.float32)
    w1, b1, w2, b2 = init_params(kp, in_features, hidden_features, out_features)

    # Pure-JAX reference of the same math.
    h_ref = x @ w1 + b1
    h_ref = jnp.where(h_ref >= 0, h_ref, GEN_NEGSLOPE * h_ref)
    ref = jnp.tanh(h_ref @ w2 + b2)

    # f32 MXU path (exact-ish, tight tolerance).
    out_f32 = generator_forward(x, w1, b1, w2, b2, block_m=256, mxu_dtype=jnp.float32)
    out_f32 = jax.block_until_ready(out_f32)
    assert out_f32.shape == (batch, out_features)
    assert jnp.allclose(out_f32, ref, atol=1e-5, rtol=1e-5)

    # bf16 MXU path (v6e/v7x fast path), f32 accumulation -> loose tolerance.
    out_bf16 = generator_forward(x, w1, b1, w2, b2, block_m=256, mxu_dtype=jnp.bfloat16)
    out_bf16 = jax.block_until_ready(out_bf16)
    assert out_bf16.shape == (batch, out_features)
    assert jnp.allclose(out_bf16, ref, atol=3e-2, rtol=3e-2)

    print("KERNEL_OK")
</pallas_src>

<mosaic_0001>
module attributes {stable_mosaic.version = 11 : i64} {
  func.func @generator_kernel(%arg0: i32, %arg1: memref<256x128xf32, #tpu.memory_space<vmem>>, %arg2: memref<128x128xf32, #tpu.memory_space<vmem>>, %arg3: memref<1x128xf32, #tpu.memory_space<vmem>>, %arg4: memref<128x128xf32, #tpu.memory_space<vmem>>, %arg5: memref<1x128xf32, #tpu.memory_space<vmem>>, %arg6: memref<256x128xf32, #tpu.memory_space<vmem>>) attributes {dimension_semantics = [#tpu.dimension_semantics<parallel>], iteration_bounds = array<i64: 2>, scalar_prefetch = 0 : i64, scratch_operands = 0 : i64, tpu.core_type = #tpu.core_type<tc>, window_params = [{transform_indices = @transform_0, window_bounds = array<i64: 256, 128>}, {pipeline_mode = #tpu.pipeline_mode<synchronous>, transform_indices = @transform_1, window_bounds = array<i64: 128, 128>}, {pipeline_mode = #tpu.pipeline_mode<synchronous>, transform_indices = @transform_2, window_bounds = array<i64: 1, 128>}, {pipeline_mode = #tpu.pipeline_mode<synchronous>, transform_indices = @transform_3, window_bounds = array<i64: 128, 128>}, {pipeline_mode = #tpu.pipeline_mode<synchronous>, transform_indices = @transform_4, window_bounds = array<i64: 1, 128>}, {transform_indices = @transform_5, window_bounds = array<i64: 256, 128>}]} {
    %c0 = arith.constant 0 : index
    %c0_0 = arith.constant 0 : index
    %0 = vector.load %arg1[%c0, %c0_0] : memref<256x128xf32, #tpu.memory_space<vmem>>, vector<256x128xf32>
    %c0_1 = arith.constant 0 : index
    %c0_2 = arith.constant 0 : index
    %1 = vector.load %arg2[%c0_1, %c0_2] : memref<128x128xf32, #tpu.memory_space<vmem>>, vector<128x128xf32>
    %cst = arith.constant dense<0.000000e+00> : vector<256x128xf32>
    %2 = tpu.matmul %0, %1, %cst {dimension_numbers = #tpu.dot_dimension_numbers<[1], [0], [0], [1], [0, 0, 1, 1], [], []>} : vector<256x128xf32>, vector<128x128xf32>, vector<256x128xf32> -> vector<256x128xf32>
    %c0_3 = arith.constant 0 : index
    %c0_4 = arith.constant 0 : index
    %3 = vector.load %arg3[%c0_3, %c0_4] : memref<1x128xf32, #tpu.memory_space<vmem>>, vector<1x128xf32>
    %4 = vector.broadcast %3 : vector<1x128xf32> to vector<256x128xf32>
    %5 = arith.addf %2, %4 : vector<256x128xf32>
    %cst_5 = arith.constant 1.000000e-01 : f32
    %6 = vector.broadcast %cst_5 : f32 to vector<256x128xf32>
    %7 = arith.mulf %6, %5 : vector<256x128xf32>
    %8 = arith.maximumf %5, %7 : vector<256x128xf32>
    %c0_6 = arith.constant 0 : index
    %c0_7 = arith.constant 0 : index
    %9 = vector.load %arg4[%c0_6, %c0_7] : memref<128x128xf32, #tpu.memory_space<vmem>>, vector<128x128xf32>
    %cst_8 = arith.constant dense<0.000000e+00> : vector<256x128xf32>
    %10 = tpu.matmul %8, %9, %cst_8 {dimension_numbers = #tpu.dot_dimension_numbers<[1], [0], [0], [1], [0, 0, 1, 1], [], []>} : vector<256x128xf32>, vector<128x128xf32>, vector<256x128xf32> -> vector<256x128xf32>
    %c0_9 = arith.constant 0 : index
    %c0_10 = arith.constant 0 : index
    %11 = vector.load %arg5[%c0_9, %c0_10] : memref<1x128xf32, #tpu.memory_space<vmem>>, vector<1x128xf32>
    %12 = vector.broadcast %11 : vector<1x128xf32> to vector<256x128xf32>
    %13 = arith.addf %10, %12 : vector<256x128xf32>
    %14 = math.tanh %13 : vector<256x128xf32>
    %c0_11 = arith.constant 0 : index
    %c0_12 = arith.constant 0 : index
    %15 = vector.load %arg6[%c0_11, %c0_12] : memref<256x128xf32, #tpu.memory_space<vmem>>, vector<256x128xf32>
    tpu.vector_store %arg6[%c0_11, %c0_12], %14 {strides = array<i32>} : memref<256x128xf32, #tpu.memory_space<vmem>>, vector<256x128xf32>,
    return
  }
  func.func @transform_0(%arg0: i32) -> (i32, i32) {
    %c0_i32 = arith.constant 0 : i32
    %c0_i32_0 = arith.constant 0 : i32
    return %arg0, %c0_i32 : i32, i32
  }
  func.func @transform_1(%arg0: i32) -> (i32, i32) {
    %c0_i32 = arith.constant 0 : i32
    %c0_i32_0 = arith.constant 0 : i32
    %c0_i32_1 = arith.constant 0 : i32
    return %c0_i32, %c0_i32_0 : i32, i32
  }
  func.func @transform_2(%arg0: i32) -> (i32, i32) {
    %c0_i32 = arith.constant 0 : i32
    %c0_i32_0 = arith.constant 0 : i32
    %c0_i32_1 = arith.constant 0 : i32
    return %c0_i32, %c0_i32_0 : i32, i32
  }
  func.func @transform_3(%arg0: i32) -> (i32, i32) {
    %c0_i32 = arith.constant 0 : i32
    %c0_i32_0 = arith.constant 0 : i32
    %c0_i32_1 = arith.constant 0 : i32
    return %c0_i32, %c0_i32_0 : i32, i32
  }
  func.func @transform_4(%arg0: i32) -> (i32, i32) {
    %c0_i32 = arith.constant 0 : i32
    %c0_i32_0 = arith.constant 0 : i32
    %c0_i32_1 = arith.constant 0 : i32
    return %c0_i32, %c0_i32_0 : i32, i32
  }
  func.func @transform_5(%arg0: i32) -> (i32, i32) {
    %c0_i32 = arith.constant 0 : i32
    %c0_i32_0 = arith.constant 0 : i32
    return %arg0, %c0_i32 : i32, i32
  }
}

</mosaic_0001>

<llo_original>
// kernel: _generator_forward_impl.1
$region0: #{_generator_forward_impl.1}
  #allocation0 [shape = 'u32[]', space=smem, size = 0x4, offset = 0x4, fixed_abs, tag = 'smem constant byte address 0x4 - core index']
  #allocation1 [shape = 'u32[72,128]{1,0:T(1,128)}', space=vmem, size = 0x9000, scoped, tag = 'internal scratch']
  %s0 = inlined_call_operand.vmem [shape: f32[512,128], index: 0, kind: input, shape index: {}]
  %s1 = inlined_call_operand.vmem [shape: f32[128,128], index: 1, kind: input, shape index: {}]
  %s2 = inlined_call_operand.vmem [shape: f32[1,128], index: 2, kind: input, shape index: {}]
  %s3 = inlined_call_operand.vmem [shape: f32[128,128], index: 3, kind: input, shape index: {}]
  %s4 = inlined_call_operand.vmem [shape: f32[1,128], index: 4, kind: input, shape index: {}]
  %s5 = inlined_call_operand.vmem [shape: f32[512,128], index: 5, kind: output, shape index: {}]
  %s6 = sld [smem:[#allocation0]]
  $region53: #{_generator_forward_impl.1} parent=0
    _
  %s8 = ssub.s32 1, %s6
  %s9 = scalar_select 0, %s8, %s6
  loop: start=0, step=1, limit=4
  $region2: #{_generator_forward_impl.1} parent=0 // loop_pre_header
    _
  $region3: #{_generator_forward_impl.1} parent=0 // loop_header
    %s11 = sphi 0, %s15
    %p12 = scmp.ge.s32.totalorder %s11, 4
    %s21 = sphi 0, %s23
    %s24 = sphi 0, %s21
    %s25 = sphi 0, %s24
    %s41 = sphi 0, %s25
    %s45 = sphi 0, %s45
    %s47 = sphi 0, %s45
    %s48 = sphi 0, %s47
    %s62 = sphi 0, %s48
    %s66 = sphi 0, %s66
    %s68 = sphi 0, %s66
    %s69 = sphi 0, %s68
    %s83 = sphi 0, %s69
    %s87 = sphi 0, %s87
    %s89 = sphi 0, %s87
    %s90 = sphi 0, %s89
    %s104 = sphi 0, %s90
    %s108 = sphi 0, %s108
    %s110 = sphi 0, %s108
    %s111 = sphi 0, %s110
    %s125 = sphi 0, %s111
    %s131 = sphi 0, %s133
    %s134 = sphi 0, %s131
    %s135 = sphi 0, %s134
    %s151 = sphi 0, %s135
  $region4: #{_generator_forward_impl.1} parent=0 // loop_header_branch
    %14 = sbr.rel (%p12) target = $region8
  $region5: #{_generator_forward_impl.1} parent=0 // loop_body
    %s16 = ssub.s32 %s11, 1
    %s17 = ssub.s32 %s11, 2
    %s18 = sadd.s32 %s11, 1
    %s19 = ssub.s32 %s11, %s18
    %p20 = scmp.eq.s32.totalorder %s19, 0
    %s22 = sadd.s32 %s21, 1
    %s23 = scalar_select %p20, %s21, %s22
    %p26 = pneg %p20
    %p27 = scmp.eq.s32.totalorder %s11, 1
    %p28 = por %p26, %p27
    %p29 = scmp.ne.s32.totalorder %s21, %s24
    %p30 = scmp.eq.s32.totalorder %s11, 0
    %p31 = por %p29, %p30
    %p32 = scmp.ne.s32.totalorder %s21, %s24
    %p33 = scmp.eq.s32.totalorder %s16, 1
    %p34 = por %p32, %p33
    %p35 = scmp.ne.s32.totalorder %s24, %s25
    %p36 = scmp.eq.s32.totalorder %s16, 0
    %p37 = por %p35, %p36
    %p38 = scmp.ne.s32.totalorder %s24, %s25
    %p39 = scmp.eq.s32.totalorder %s17, 1
    %p40 = por %p38, %p39
    %p42 = scmp.ne.s32.totalorder %s25, %s41
    %p43 = scmp.eq.s32.totalorder %s17, 0
    %p44 = por %p42, %p43
    %s46 = sadd.s32 %s45, 1
    %p49 = scmp.eq.s32.totalorder %s11, 1
    %p50 = scmp.ne.s32.totalorder %s45, %s47
    %p51 = scmp.eq.s32.totalorder %s11, 0
    %p52 = por %p50, %p51
    %p53 = scmp.ne.s32.totalorder %s45, %s47
    %p54 = scmp.eq.s32.totalorder %s16, 1
    %p55 = por %p53, %p54
    %p56 = scmp.ne.s32.totalorder %s47, %s48
    %p57 = scmp.eq.s32.totalorder %s16, 0
    %p58 = por %p56, %p57
    %p59 = scmp.ne.s32.totalorder %s47, %s48
    %p60 = scmp.eq.s32.totalorder %s17, 1
    %p61 = por %p59, %p60
    %p63 = scmp.ne.s32.totalorder %s48, %s62
    %p64 = scmp.eq.s32.totalorder %s17, 0
    %p65 = por %p63, %p64
    %s67 = sadd.s32 %s66, 1
    %p70 = scmp.eq.s32.totalorder %s11, 1
    %p71 = scmp.ne.s32.totalorder %s66, %s68
    %p72 = scmp.eq.s32.totalorder %s11, 0
    %p73 = por %p71, %p72
    %p74 = scmp.ne.s32.totalorder %s66, %s68
    %p75 = scmp.eq.s32.totalorder %s16, 1
    %p76 = por %p74, %p75
    %p77 = scmp.ne.s32.totalorder %s68, %s69
    %p78 = scmp.eq.s32.totalorder %s16, 0
    %p79 = por %p77, %p78
    %p80 = scmp.ne.s32.totalorder %s68, %s69
    %p81 = scmp.eq.s32.totalorder %s17, 1
    %p82 = por %p80, %p81
    %p84 = scmp.ne.s32.totalorder %s69, %s83
    %p85 = scmp.eq.s32.totalorder %s17, 0
    %p86 = por %p84, %p85
    %s88 = sadd.s32 %s87, 1
    %p91 = scmp.eq.s32.totalorder %s11, 1
    %p92 = scmp.ne.s32.totalorder %s87, %s89
    %p93 = scmp.eq.s32.totalorder %s11, 0
    %p94 = por %p92, %p93
    %p95 = scmp.ne.s32.totalorder %s87, %s89
    %p96 = scmp.eq.s32.totalorder %s16, 1
    %p97 = por %p95, %p96
    %p98 = scmp.ne.s32.totalorder %s89, %s90
    %p99 = scmp.eq.s32.totalorder %s16, 0
    %p100 = por %p98, %p99
    %p101 = scmp.ne.s32.totalorder %s89, %s90
    %p102 = scmp.eq.s32.totalorder %s17, 1
    %p103 = por %p101, %p102
    %p105 = scmp.ne.s32.totalorder %s90, %s104
    %p106 = scmp.eq.s32.totalorder %s17, 0
    %p107 = por %p105, %p106
    %s109 = sadd.s32 %s108, 1
    %p112 = scmp.eq.s32.totalorder %s11, 1
    %p113 = scmp.ne.s32.totalorder %s108, %s110
    %p114 = scmp.eq.s32.totalorder %s11, 0
    %p115 = por %p113, %p114
    %p116 = scmp.ne.s32.totalorder %s108, %s110
    %p117 = scmp.eq.s32.totalorder %s16, 1
    %p118 = por %p116, %p117
    %p119 = scmp.ne.s32.totalorder %s110, %s111
    %p120 = scmp.eq.s32.totalorder %s16, 0
    %p121 = por %p119, %p120
    %p122 = scmp.ne.s32.totalorder %s110, %s111
    %p123 = scmp.eq.s32.totalorder %s17, 1
    %p124 = por %p122, %p123
    %p126 = scmp.ne.s32.totalorder %s111, %s125
    %p127 = scmp.eq.s32.totalorder %s17, 0
    %p128 = por %p126, %p127
    %s129 = ssub.s32 %s11, %s18
    %p130 = scmp.eq.s32.totalorder %s129, 0
    %s132 = sadd.s32 %s131, 1
    %s133 = scalar_select %p130, %s131, %s132
    %p136 = pneg %p130
    %p137 = scmp.eq.s32.totalorder %s11, 1
    %p138 = por %p136, %p137
    %p139 = scmp.ne.s32.totalorder %s131, %s134
    %p140 = scmp.eq.s32.totalorder %s11, 0
    %p141 = por %p139, %p140
    %p142 = scmp.ne.s32.totalorder %s131, %s134
    %p143 = scmp.eq.s32.totalorder %s16, 1
    %p144 = por %p142, %p143
    %p145 = scmp.ne.s32.totalorder %s134, %s135
    %p146 = scmp.eq.s32.totalorder %s16, 0
    %p147 = por %p145, %p146
    %p148 = scmp.ne.s32.totalorder %s134, %s135
    %p149 = scmp.eq.s32.totalorder %s17, 1
    %p150 = por %p148, %p149
    %p152 = scmp.ne.s32.totalorder %s135, %s151
    %p153 = scmp.eq.s32.totalorder %s17, 0
    %p154 = por %p152, %p153
    %p155 = scmp.le.s32.totalorder 1, %s11
    %p156 = scmp.lt.s32.totalorder %s11, 3
    %p157 = pnand %p155, %p156
    %p158 = pneg %p157
    // Predicated region
    $region9: #{_generator_forward_impl.1} parent=5 // pred_check
      _
    $region10: #{_generator_forward_impl.1} parent=5 // pred_check_branch
      %160 = sbr.rel (%p157) target = $region12
    $region11: #{_generator_forward_impl.1} parent=5 // pred_region
      %s161 = ssub.s32 %s11, 1
      // Predicated region
      $region13: #{_generator_forward_impl.1} parent=11 // pred_check
        %p162 = pneg %p58
      $region14: #{_generator_forward_impl.1} parent=11 // pred_check_branch
        %164 = sbr.rel (%p162) target = $region16
      $region15: #{_generator_forward_impl.1} parent=11 // pred_region
        _
      $region16: #{_generator_forward_impl.1} parent=11 // pred_fallthru
        _
      // Predicated region
      $region17: #{_generator_forward_impl.1} parent=11 // pred_check
        %p165 = pneg %p79
      $region18: #{_generator_forward_impl.1} parent=11 // pred_check_branch
        %167 = sbr.rel (%p165) target = $region20
      $region19: #{_generator_forward_impl.1} parent=11 // pred_region
        _
      $region20: #{_generator_forward_impl.1} parent=11 // pred_fallthru
        _
      // Predicated region
      $region21: #{_generator_forward_impl.1} parent=11 // pred_check
        %p168 = pneg %p100
      $region22: #{_generator_forward_impl.1} parent=11 // pred_check_branch
        %170 = sbr.rel (%p168) target = $region24
      $region23: #{_generator_forward_impl.1} parent=11 // pred_region
        _
      $region24: #{_generator_forward_impl.1} parent=11 // pred_fallthru
        _
      // Predicated region
      $region25: #{_generator_forward_impl.1} parent=11 // pred_check
        %p171 = pneg %p121
      $region26: #{_generator_forward_impl.1} parent=11 // pred_check_branch
        %173 = sbr.rel (%p171) target = $region28
      $region27: #{_generator_forward_impl.1} parent=11 // pred_region
        _
      $region28: #{_generator_forward_impl.1} parent=11 // pred_fallthru
        _
    $region12: #{_generator_forward_impl.1} parent=5 // pred_fallthru
      _
    %p174 = scmp.lt.s32.totalorder %s11, 2
    // Predicated region
    $region29: #{_generator_forward_impl.1} parent=5 // pred_check
      %p175 = pneg %p174
    $region30: #{_generator_forward_impl.1} parent=5 // pred_check_branch
      %177 = sbr.rel (%p175) target = $region32
    $region31: #{_generator_forward_impl.1} parent=5 // pred_region
      // Predicated region
      $region33: #{_generator_forward_impl.1} parent=31 // pred_check
        %p178 = pneg %p31
      $region34: #{_generator_forward_impl.1} parent=31 // pred_check_branch
        %180 = sbr.rel (%p178) target = $region36
      $region35: #{_generator_forward_impl.1} parent=31 // pred_region
        %s181 = smul.u32 32, %s11
        %p182 = scmp.lt.s32.totalorder %s181, 63
        %s183 = scalar_select %p182, %s181, 63
        %s184 = smul.addr %s183, 8
        %s185 = scalar_lea.vmem %s0, %s184
        %s186 = smul.u32 32, %s11
      $region36: #{_generator_forward_impl.1} parent=31 // pred_fallthru
        _
    $region32: #{_generator_forward_impl.1} parent=5 // pred_fallthru
      _
    %p187 = scmp.le.s32.totalorder 1, %s11
    %p188 = scmp.lt.s32.totalorder %s11, 3
    %p189 = pnand %p187, %p188
    %p190 = pneg %p189
    // Predicated region
    $region37: #{_generator_forward_impl.1} parent=5 // pred_check
      _
    $region38: #{_generator_forward_impl.1} parent=5 // pred_check_branch
      %192 = sbr.rel (%p189) target = $region40
    $region39: #{_generator_forward_impl.1} parent=5 // pred_region
      %s193 = ssub.s32 %s11, 1
      %s194 = smul.u32 32, %s16
      %p195 = scmp.lt.s32.totalorder %s194, 63
      %s196 = scalar_select %p195, %s194, 63
      %s197 = smul.addr %s196, 8
      %s198 = scalar_lea.vmem %s0, %s197
      %p199 = pneg %p37
      %p200 = pneg %p34
      %p201 = pneg %p58
      %p202 = pneg %p55
      %p203 = pneg %p79
      %p204 = pneg %p76
      %p205 = pneg %p100
      %p206 = pneg %p97
      %p207 = pneg %p121
      %p208 = pneg %p118
      %p209 = pneg %p147
      %p210 = pneg %p144
      %s211 = smul.u32 32, %s16
      %p212 = scmp.lt.s32.totalorder %s211, 63
      %s213 = scalar_select %p212, %s211, 63
      %s214 = smul.addr %s213, 8
      %s215 = scalar_lea.vmem %s5, %s214
      %s216 = smul.u32 32, %s16
      %p217 = scmp.lt.s32.totalorder %s216, 63
      %s218 = scalar_select %p217, %s216, 63
      %s219 = smul.addr %s218, 8
      %s220 = scalar_lea.vmem %s0, %s219
      %s221 = smul.u32 32, %s16
      %s222 = smul.u32 32, %s16
      %p223 = scmp.lt.s32.totalorder %s222, 63
      %s224 = scalar_select %p223, %s222, 63
      %s225 = smul.addr %s224, 8
      %s226 = scalar_lea.vmem %s5, %s225
      %s227 = smul.u32 32, %s16
      %v228 = vld [vmem:[%s220] sm:$0xff]
      %v229 = vld [vmem:[%s220 + $0x8] sm:$0xff]
      %v230 = vld [vmem:[%s220 + $0x10] sm:$0xff]
      %v231 = vld [vmem:[%s220 + $0x18] sm:$0xff]
      %v232 = vld [vmem:[%s220 + $0x20] sm:$0xff]
      %v233 = vld [vmem:[%s220 + $0x28] sm:$0xff]
      %v234 = vld [vmem:[%s220 + $0x30] sm:$0xff]
      %v235 = vld [vmem:[%s220 + $0x38] sm:$0xff]
      %v236 = vld [vmem:[%s220 + $0x40] sm:$0xff]
      %v237 = vld [vmem:[%s220 + $0x48] sm:$0xff]
      %v238 = vld [vmem:[%s220 + $0x50] sm:$0xff]
      %v239 = vld [vmem:[%s220 + $0x58] sm:$0xff]
      %v240 = vld [vmem:[%s220 + $0x60] sm:$0xff]
      %v241 = vld [vmem:[%s220 + $0x68] sm:$0xff]
      %v242 = vld [vmem:[%s220 + $0x70] sm:$0xff]
      %v243 = vld [vmem:[%s220 + $0x78] sm:$0xff]
      %v244 = vld [vmem:[%s220 + $0x80] sm:$0xff]
      %v245 = vld [vmem:[%s220 + $0x88] sm:$0xff]
      %v246 = vld [vmem:[%s220 + $0x90] sm:$0xff]
      %v247 = vld [vmem:[%s220 + $0x98] sm:$0xff]
      %v248 = vld [vmem:[%s220 + $0xa0] sm:$0xff]
      %v249 = vld [vmem:[%s220 + $0xa8] sm:$0xff]
      %v250 = vld [vmem:[%s220 + $0xb0] sm:$0xff]
      %v251 = vld [vmem:[%s220 + $0xb8] sm:$0xff]
      %v252 = vld [vmem:[%s220 + $0xc0] sm:$0xff]
      %v253 = vld [vmem:[%s220 + $0xc8] sm:$0xff]
      %v254 = vld [vmem:[%s220 + $0xd0] sm:$0xff]
      %v255 = vld [vmem:[%s220 + $0xd8] sm:$0xff]
      %v256 = vld [vmem:[%s220 + $0xe0] sm:$0xff]
      %v257 = vld [vmem:[%s220 + $0xe8] sm:$0xff]
      %v258 = vld [vmem:[%s220 + $0xf0] sm:$0xff]
      %v259 = vld [vmem:[%s220 + $0xf8] sm:$0xff]
      %v260 = vld [vmem:[%s1] sm:$0xff]
      %v261 = vld [vmem:[%s1 + $0x8] sm:$0xff]
      %v262 = vld [vmem:[%s1 + $0x10] sm:$0xff]
      %v263 = vld [vmem:[%s1 + $0x18] sm:$0xff]
      %v264 = vld [vmem:[%s1 + $0x20] sm:$0xff]
      %v265 = vld [vmem:[%s1 + $0x28] sm:$0xff]
      %v266 = vld [vmem:[%s1 + $0x30] sm:$0xff]
      %v267 = vld [vmem:[%s1 + $0x38] sm:$0xff]
      %v268 = vld [vmem:[%s1 + $0x40] sm:$0xff]
      %v269 = vld [vmem:[%s1 + $0x48] sm:$0xff]
      %v270 = vld [vmem:[%s1 + $0x50] sm:$0xff]
      %v271 = vld [vmem:[%s1 + $0x58] sm:$0xff]
      %v272 = vld [vmem:[%s1 + $0x60] sm:$0xff]
      %v273 = vld [vmem:[%s1 + $0x68] sm:$0xff]
      %v274 = vld [vmem:[%s1 + $0x70] sm:$0xff]
      %v275 = vld [vmem:[%s1 + $0x78] sm:$0xff]
      %v276 = vld [vmem:[%s2] sm:$0x1]
      %v278 = vperm.slane %v276, 0
      %280 = vmatpush.msra.mxu0 %v275
      %281 = vmatpush.msra.mxu0 %v274
      %282 = vmatpush.msra.mxu0 %v273
      %283 = vmatpush.msra.mxu0 %v272
      %284 = vmatpush.msra.mxu0 %v271
      %285 = vmatpush.msra.mxu0 %v270
      %286 = vmatpush.msra.mxu0 %v269
      %287 = vmatpush.msra.mxu0 %v268
      %288 = vmatpush.msra.mxu0 %v267
      %289 = vmatpush.msra.mxu0 %v266
      %290 = vmatpush.msra.mxu0 %v265
      %291 = vmatpush.msra.mxu0 %v264
      %292 = vmatpush.msra.mxu0 %v263
      %293 = vmatpush.msra.mxu0 %v262
      %294 = vmatpush.msra.mxu0 %v261
      %295 = vmatpush.msra.mxu0 %v260
      %296 = vmatmul.f32.gmra.mxu0 %v228
      %v297 = vpop.f32.mrf.mxu0
      %v298 = vadd.f32 %v278, %v297
      %299 = vmatmul.f32.gmra.mxu0 %v229
      %v300 = vpop.f32.mrf.mxu0
      %v301 = vadd.f32 %v278, %v300
      %302 = vmatmul.f32.gmra.mxu0 %v230
      %v303 = vpop.f32.mrf.mxu0
      %v304 = vadd.f32 %v278, %v303
      %305 = vmatmul.f32.gmra.mxu0 %v231
      %v306 = vpop.f32.mrf.mxu0
      %v307 = vadd.f32 %v278, %v306
      %308 = vmatmul.f32.gmra.mxu0 %v232
      %v309 = vpop.f32.mrf.mxu0
      %v310 = vadd.f32 %v278, %v309
      %311 = vmatmul.f32.gmra.mxu0 %v233
      %v312 = vpop.f32.mrf.mxu0
      %v313 = vadd.f32 %v278, %v312
      %314 = vmatmul.f32.gmra.mxu0 %v234
      %v315 = vpop.f32.mrf.mxu0
      %v316 = vadd.f32 %v278, %v315
      %317 = vmatmul.f32.gmra.mxu0 %v235
      %v318 = vpop.f32.mrf.mxu0
      %v319 = vadd.f32 %v278, %v318
      %320 = vmatmul.f32.gmra.mxu0 %v236
      %v321 = vpop.f32.mrf.mxu0
      %v322 = vadd.f32 %v278, %v321
      %323 = vmatmul.f32.gmra.mxu0 %v237
      %v324 = vpop.f32.mrf.mxu0
      %v325 = vadd.f32 %v278, %v324
      %326 = vmatmul.f32.gmra.mxu0 %v238
      %v327 = vpop.f32.mrf.mxu0
      %v328 = vadd.f32 %v278, %v327
      %329 = vmatmul.f32.gmra.mxu0 %v239
      %v330 = vpop.f32.mrf.mxu0
      %v331 = vadd.f32 %v278, %v330
      %332 = vmatmul.f32.gmra.mxu0 %v240
      %v333 = vpop.f32.mrf.mxu0
      %v334 = vadd.f32 %v278, %v333
      %335 = vmatmul.f32.gmra.mxu0 %v241
      %v336 = vpop.f32.mrf.mxu0
      %v337 = vadd.f32 %v278, %v336
      %338 = vmatmul.f32.gmra.mxu0 %v242
      %v339 = vpop.f32.mrf.mxu0
      %v340 = vadd.f32 %v278, %v339
      %341 = vmatmul.f32.gmra.mxu0 %v243
      %v342 = vpop.f32.mrf.mxu0
      %v343 = vadd.f32 %v278, %v342
      %344 = vmatmul.f32.gmra.mxu0 %v244
      %v345 = vpop.f32.mrf.mxu0
      %v346 = vadd.f32 %v278, %v345
      %347 = vmatmul.f32.gmra.mxu0 %v245
      %v348 = vpop.f32.mrf.mxu0
      %v349 = vadd.f32 %v278, %v348
      %350 = vmatmul.f32.gmra.mxu0 %v246
      %v351 = vpop.f32.mrf.mxu0
      %v352 = vadd.f32 %v278, %v351
      %353 = vmatmul.f32.gmra.mxu0 %v247
      %v354 = vpop.f32.mrf.mxu0
      %v355 = vadd.f32 %v278, %v354
      %356 = vmatmul.f32.gmra.mxu0 %v248
      %v357 = vpop.f32.mrf.mxu0
      %v358 = vadd.f32 %v278, %v357
      %359 = vmatmul.f32.gmra.mxu0 %v249
      %v360 = vpop.f32.mrf.mxu0
      %v361 = vadd.f32 %v278, %v360
      %362 = vmatmul.f32.gmra.mxu0 %v250
      %v363 = vpop.f32.mrf.mxu0
      %v364 = vadd.f32 %v278, %v363
      %365 = vmatmul.f32.gmra.mxu0 %v251
      %v366 = vpop.f32.mrf.mxu0
      %v367 = vadd.f32 %v278, %v366
      %368 = vmatmul.f32.gmra.mxu0 %v252
      %v369 = vpop.f32.mrf.mxu0
      %v370 = vadd.f32 %v278, %v369
      %371 = vmatmul.f32.gmra.mxu0 %v253
      %v372 = vpop.f32.mrf.mxu0
      %v373 = vadd.f32 %v278, %v372
      %374 = vmatmul.f32.gmra.mxu0 %v254
      %v375 = vpop.f32.mrf.mxu0
      %v376 = vadd.f32 %v278, %v375
      %377 = vmatmul.f32.gmra.mxu0 %v255
      %v378 = vpop.f32.mrf.mxu0
      %v379 = vadd.f32 %v278, %v378
      %380 = vmatmul.f32.gmra.mxu0 %v256
      %v381 = vpop.f32.mrf.mxu0
      %v382 = vadd.f32 %v278, %v381
      %383 = vmatmul.f32.gmra.mxu0 %v257
      %v384 = vpop.f32.mrf.mxu0
      %v385 = vadd.f32 %v278, %v384
      %386 = vmatmul.f32.gmra.mxu0 %v258
      %v387 = vpop.f32.mrf.mxu0
      %v388 = vadd.f32 %v278, %v387
      %389 = vmatmul.f32.gmra.mxu0 %v259
      %v390 = vpop.f32.mrf.mxu0
      %v391 = vadd.f32 %v278, %v390
      %392 = vdwg.mxu0
      %v393 = vmul.f32 %v298, 0.1
      %v394 = vmul.f32 %v301, 0.1
      %v395 = vmul.f32 %v304, 0.1
      %v396 = vmul.f32 %v307, 0.1
      %v397 = vmul.f32 %v310, 0.1
      %v398 = vmul.f32 %v313, 0.1
      %v399 = vmul.f32 %v316, 0.1
      %v400 = vmul.f32 %v319, 0.1
      %v401 = vmul.f32 %v322, 0.1
      %v402 = vmul.f32 %v325, 0.1
      %v403 = vmul.f32 %v328, 0.1
      %v404 = vmul.f32 %v331, 0.1
      %v405 = vmul.f32 %v334, 0.1
      %v406 = vmul.f32 %v337, 0.1
      %v407 = vmul.f32 %v340, 0.1
      %v408 = vmul.f32 %v343, 0.1
      %v409 = vmul.f32 %v346, 0.1
      %v410 = vmul.f32 %v349, 0.1
      %v411 = vmul.f32 %v352, 0.1
      %v412 = vmul.f32 %v355, 0.1
      %v413 = vmul.f32 %v358, 0.1
      %v414 = vmul.f32 %v361, 0.1
      %v415 = vmul.f32 %v364, 0.1
      %v416 = vmul.f32 %v367, 0.1
      %v417 = vmul.f32 %v370, 0.1
      %v418 = vmul.f32 %v373, 0.1
      %v419 = vmul.f32 %v376, 0.1
      %v420 = vmul.f32 %v379, 0.1
      %v421 = vmul.f32 %v382, 0.1
      %v422 = vmul.f32 %v385, 0.1
      %v423 = vmul.f32 %v388, 0.1
      %v424 = vmul.f32 %v391, 0.1
      %v425 = vmax.f32 %v298, %v393
      %v426 = vmax.f32 %v301, %v394
      %v427 = vmax.f32 %v304, %v395
      %v428 = vmax.f32 %v307, %v396
      %v429 = vmax.f32 %v310, %v397
      %v430 = vmax.f32 %v313, %v398
      %v431 = vmax.f32 %v316, %v399
      %v432 = vmax.f32 %v319, %v400
      %v433 = vmax.f32 %v322, %v401
      %v434 = vmax.f32 %v325, %v402
      %v435 = vmax.f32 %v328, %v403
      %v436 = vmax.f32 %v331, %v404
      %v437 = vmax.f32 %v334, %v405
      %v438 = vmax.f32 %v337, %v406
      %v439 = vmax.f32 %v340, %v407
      %v440 = vmax.f32 %v343, %v408
      %v441 = vmax.f32 %v346, %v409
      %v442 = vmax.f32 %v349, %v410
      %v443 = vmax.f32 %v352, %v411
      %v444 = vmax.f32 %v355, %v412
      %v445 = vmax.f32 %v358, %v413
      %v446 = vmax.f32 %v361, %v414
      %v447 = vmax.f32 %v364, %v415
      %v448 = vmax.f32 %v367, %v416
      %v449 = vmax.f32 %v370, %v417
      %v450 = vmax.f32 %v373, %v418
      %v451 = vmax.f32 %v376, %v419
      %v452 = vmax.f32 %v379, %v420
      %v453 = vmax.f32 %v382, %v421
      %v454 = vmax.f32 %v385, %v422
      %v455 = vmax.f32 %v388, %v423
      %v456 = vmax.f32 %v391, %v424
      %v457 = vld [vmem:[%s3] sm:$0xff]
      %v458 = vld [vmem:[%s3 + $0x8] sm:$0xff]
      %v459 = vld [vmem:[%s3 + $0x10] sm:$0xff]
      %v460 = vld [vmem:[%s3 + $0x18] sm:$0xff]
      %v461 = vld [vmem:[%s3 + $0x20] sm:$0xff]
      %v462 = vld [vmem:[%s3 + $0x28] sm:$0xff]
      %v463 = vld [vmem:[%s3 + $0x30] sm:$0xff]
      %v464 = vld [vmem:[%s3 + $0x38] sm:$0xff]
      %v465 = vld [vmem:[%s3 + $0x40] sm:$0xff]
      %v466 = vld [vmem:[%s3 + $0x48] sm:$0xff]
      %v467 = vld [vmem:[%s3 + $0x50] sm:$0xff]
      %v468 = vld [vmem:[%s3 + $0x58] sm:$0xff]
      %v469 = vld [vmem:[%s3 + $0x60] sm:$0xff]
      %v470 = vld [vmem:[%s3 + $0x68] sm:$0xff]
      %v471 = vld [vmem:[%s3 + $0x70] sm:$0xff]
      %v472 = vld [vmem:[%s3 + $0x78] sm:$0xff]
      %v473 = vld [vmem:[%s4] sm:$0x1]
      %v475 = vperm.slane %v473, 0
      %477 = vmatpush.msra.mxu0 %v472
      %478 = vmatpush.msra.mxu0 %v471
      %479 = vmatpush.msra.mxu0 %v470
      %480 = vmatpush.msra.mxu0 %v469
      %481 = vmatpush.msra.mxu0 %v468
      %482 = vmatpush.msra.mxu0 %v467
      %483 = vmatpush.msra.mxu0 %v466
      %484 = vmatpush.msra.mxu0 %v465
      %485 = vmatpush.msra.mxu0 %v464
      %486 = vmatpush.msra.mxu0 %v463
      %487 = vmatpush.msra.mxu0 %v462
      %488 = vmatpush.msra.mxu0 %v461
      %489 = vmatpush.msra.mxu0 %v460
      %490 = vmatpush.msra.mxu0 %v459
      %491 = vmatpush.msra.mxu0 %v458
      %492 = vmatpush.msra.mxu0 %v457
      %493 = vmatmul.f32.gmra.mxu0 %v425
      %v494 = vpop.f32.mrf.mxu0
      %v495 = vadd.f32 %v475, %v494
      %496 = vmatmul.f32.gmra.mxu0 %v426
      %v497 = vpop.f32.mrf.mxu0
      %v498 = vadd.f32 %v475, %v497
      %499 = vmatmul.f32.gmra.mxu0 %v427
      %v500 = vpop.f32.mrf.mxu0
      %v501 = vadd.f32 %v475, %v500
      %502 = vmatmul.f32.gmra.mxu0 %v428
      %v503 = vpop.f32.mrf.mxu0
      %v504 = vadd.f32 %v475, %v503
      %505 = vmatmul.f32.gmra.mxu0 %v429
      %v506 = vpop.f32.mrf.mxu0
      %v507 = vadd.f32 %v475, %v506
      %508 = vmatmul.f32.gmra.mxu0 %v430
      %v509 = vpop.f32.mrf.mxu0
      %v510 = vadd.f32 %v475, %v509
      %511 = vmatmul.f32.gmra.mxu0 %v431
      %v512 = vpop.f32.mrf.mxu0
      %v513 = vadd.f32 %v475, %v512
      %514 = vmatmul.f32.gmra.mxu0 %v432
      %v515 = vpop.f32.mrf.mxu0
      %v516 = vadd.f32 %v475, %v515
      %517 = vmatmul.f32.gmra.mxu0 %v433
      %v518 = vpop.f32.mrf.mxu0
      %v519 = vadd.f32 %v475, %v518
      %520 = vmatmul.f32.gmra.mxu0 %v434
      %v521 = vpop.f32.mrf.mxu0
      %v522 = vadd.f32 %v475, %v521
      %523 = vmatmul.f32.gmra.mxu0 %v435
      %v524 = vpop.f32.mrf.mxu0
      %v525 = vadd.f32 %v475, %v524
      %526 = vmatmul.f32.gmra.mxu0 %v436
      %v527 = vpop.f32.mrf.mxu0
      %v528 = vadd.f32 %v475, %v527
      %529 = vmatmul.f32.gmra.mxu0 %v437
      %v530 = vpop.f32.mrf.mxu0
      %v531 = vadd.f32 %v475, %v530
      %532 = vmatmul.f32.gmra.mxu0 %v438
      %v533 = vpop.f32.mrf.mxu0
      %v534 = vadd.f32 %v475, %v533
      %535 = vmatmul.f32.gmra.mxu0 %v439
      %v536 = vpop.f32.mrf.mxu0
      %v537 = vadd.f32 %v475, %v536
      %538 = vmatmul.f32.gmra.mxu0 %v440
      %v539 = vpop.f32.mrf.mxu0
      %v540 = vadd.f32 %v475, %v539
      %541 = vmatmul.f32.gmra.mxu0 %v441
      %v542 = vpop.f32.mrf.mxu0
      %v543 = vadd.f32 %v475, %v542
      %544 = vmatmul.f32.gmra.mxu0 %v442
      %v545 = vpop.f32.mrf.mxu0
      %v546 = vadd.f32 %v475, %v545
      %547 = vmatmul.f32.gmra.mxu0 %v443
      %v548 = vpop.f32.mrf.mxu0
      %v549 = vadd.f32 %v475, %v548
      %550 = vmatmul.f32.gmra.mxu0 %v444
      %v551 = vpop.f32.mrf.mxu0
      %v552 = vadd.f32 %v475, %v551
      %553 = vmatmul.f32.gmra.mxu0 %v445
      %v554 = vpop.f32.mrf.mxu0
      %v555 = vadd.f32 %v475, %v554
      %556 = vmatmul.f32.gmra.mxu0 %v446
      %v557 = vpop.f32.mrf.mxu0
      %v558 = vadd.f32 %v475, %v557
      %559 = vmatmul.f32.gmra.mxu0 %v447
      %v560 = vpop.f32.mrf.mxu0
      %v561 = vadd.f32 %v475, %v560
      %562 = vmatmul.f32.gmra.mxu0 %v448
      %v563 = vpop.f32.mrf.mxu0
      %v564 = vadd.f32 %v475, %v563
      %565 = vmatmul.f32.gmra.mxu0 %v449
      %v566 = vpop.f32.mrf.mxu0
      %v567 = vadd.f32 %v475, %v566
      %568 = vmatmul.f32.gmra.mxu0 %v450
      %v569 = vpop.f32.mrf.mxu0
      %v570 = vadd.f32 %v475, %v569
      %571 = vmatmul.f32.gmra.mxu0 %v451
      %v572 = vpop.f32.mrf.mxu0
      %v573 = vadd.f32 %v475, %v572
      %574 = vmatmul.f32.gmra.mxu0 %v452
      %v575 = vpop.f32.mrf.mxu0
      %v576 = vadd.f32 %v475, %v575
      %577 = vmatmul.f32.gmra.mxu0 %v453
      %v578 = vpop.f32.mrf.mxu0
      %v579 = vadd.f32 %v475, %v578
      %580 = vmatmul.f32.gmra.mxu0 %v454
      %v581 = vpop.f32.mrf.mxu0
      %v582 = vadd.f32 %v475, %v581
      %583 = vmatmul.f32.gmra.mxu0 %v455
      %v584 = vpop.f32.mrf.mxu0
      %v585 = vadd.f32 %v475, %v584
      %586 = vmatmul.f32.gmra.mxu0 %v456
      %v587 = vpop.f32.mrf.mxu0
      %v588 = vadd.f32 %v475, %v587
      %589 = vdwg.mxu0
      %v590 = vtanh.pop %v495
      %v591 = vtanh.pop %v498
      %v592 = vtanh.pop %v501
      %v593 = vtanh.pop %v504
      %v594 = vtanh.pop %v507
      %v595 = vtanh.pop %v510
      %v596 = vtanh.pop %v513
      %v597 = vtanh.pop %v516
      %v598 = vtanh.pop %v519
      %v599 = vtanh.pop %v522
      %v600 = vtanh.pop %v525
      %v601 = vtanh.pop %v528
      %v602 = vtanh.pop %v531
      %v603 = vtanh.pop %v534
      %v604 = vtanh.pop %v537
      %v605 = vtanh.pop %v540
      %v606 = vtanh.pop %v543
      %v607 = vtanh.pop %v546
      %v608 = vtanh.pop %v549
      %v609 = vtanh.pop %v552
      %v610 = vtanh.pop %v555
      %v611 = vtanh.pop %v558
      %v612 = vtanh.pop %v561
      %v613 = vtanh.pop %v564
      %v614 = vtanh.pop %v567
      %v615 = vtanh.pop %v570
      %v616 = vtanh.pop %v573
      %v617 = vtanh.pop %v576
      %v618 = vtanh.pop %v579
      %v619 = vtanh.pop %v582
      %v620 = vtanh.pop %v585
      %v621 = vtanh.pop %v588
      %622 = vst [vmem:[%s226] sm:$0xff] %v590
      %623 = vst [vmem:[%s226 + $0x8] sm:$0xff] %v591
      %624 = vst [vmem:[%s226 + $0x10] sm:$0xff] %v592
      %625 = vst [vmem:[%s226 + $0x18] sm:$0xff] %v593
      %626 = vst [vmem:[%s226 + $0x20] sm:$0xff] %v594
      %627 = vst [vmem:[%s226 + $0x28] sm:$0xff] %v595
      %628 = vst [vmem:[%s226 + $0x30] sm:$0xff] %v596
      %629 = vst [vmem:[%s226 + $0x38] sm:$0xff] %v597
      %630 = vst [vmem:[%s226 + $0x40] sm:$0xff] %v598
      %631 = vst [vmem:[%s226 + $0x48] sm:$0xff] %v599
      %632 = vst [vmem:[%s226 + $0x50] sm:$0xff] %v600
      %633 = vst [vmem:[%s226 + $0x58] sm:$0xff] %v601
      %634 = vst [vmem:[%s226 + $0x60] sm:$0xff] %v602
      %635 = vst [vmem:[%s226 + $0x68] sm:$0xff] %v603
      %636 = vst [vmem:[%s226 + $0x70] sm:$0xff] %v604
      %637 = vst [vmem:[%s226 + $0x78] sm:$0xff] %v605
      %638 = vst [vmem:[%s226 + $0x80] sm:$0xff] %v606
      %639 = vst [vmem:[%s226 + $0x88] sm:$0xff] %v607
      %640 = vst [vmem:[%s226 + $0x90] sm:$0xff] %v608
      %641 = vst [vmem:[%s226 + $0x98] sm:$0xff] %v609
      %642 = vst [vmem:[%s226 + $0xa0] sm:$0xff] %v610
      %643 = vst [vmem:[%s226 + $0xa8] sm:$0xff] %v611
      %644 = vst [vmem:[%s226 + $0xb0] sm:$0xff] %v612
      %645 = vst [vmem:[%s226 + $0xb8] sm:$0xff] %v613
      %646 = vst [vmem:[%s226 + $0xc0] sm:$0xff] %v614
      %647 = vst [vmem:[%s226 + $0xc8] sm:$0xff] %v615
      %648 = vst [vmem:[%s226 + $0xd0] sm:$0xff] %v616
      %649 = vst [vmem:[%s226 + $0xd8] sm:$0xff] %v617
      %650 = vst [vmem:[%s226 + $0xe0] sm:$0xff] %v618
      %651 = vst [vmem:[%s226 + $0xe8] sm:$0xff] %v619
      %652 = vst [vmem:[%s226 + $0xf0] sm:$0xff] %v620
      %653 = vst [vmem:[%s226 + $0xf8] sm:$0xff] %v621
      %s654 = smul.u32 32, %s16
      %p655 = scmp.lt.s32.totalorder %s654, 63
      %s656 = scalar_select %p655, %s654, 63
      %s657 = smul.addr %s656, 8
      %s658 = scalar_lea.vmem %s5, %s657
      // Predicated region
      $region41: #{_generator_forward_impl.1} parent=39 // pred_check
        %p659 = pneg %p144
      $region42: #{_generator_forward_impl.1} parent=39 // pred_check_branch
        %661 = sbr.rel (%p659) target = $region44
      $region43: #{_generator_forward_impl.1} parent=39 // pred_region
        %s662 = smul.u32 32, %s16
      $region44: #{_generator_forward_impl.1} parent=39 // pred_fallthru
        _
    $region40: #{_generator_forward_impl.1} parent=5 // pred_fallthru
      _
    %p663 = scmp.le.s32.totalorder 2, %s11
    // Predicated region
    $region45: #{_generator_forward_impl.1} parent=5 // pred_check
      %p664 = pneg %p663
    $region46: #{_generator_forward_impl.1} parent=5 // pred_check_branch
      %666 = sbr.rel (%p664) target = $region48
    $region47: #{_generator_forward_impl.1} parent=5 // pred_region
      %s667 = ssub.s32 %s11, 2
      // Predicated region
      $region49: #{_generator_forward_impl.1} parent=47 // pred_check
        %p668 = pneg %p150
      $region50: #{_generator_forward_impl.1} parent=47 // pred_check_branch
        %670 = sbr.rel (%p668) target = $region52
      $region51: #{_generator_forward_impl.1} parent=47 // pred_region
        %s671 = smul.u32 32, %s17
        %p672 = scmp.lt.s32.totalorder %s671, 63
        %s673 = scalar_select %p672, %s671, 63
        %s674 = smul.addr %s673, 8
        %s675 = scalar_lea.vmem %s5, %s674
      $region52: #{_generator_forward_impl.1} parent=47 // pred_fallthru
        _
    $region48: #{_generator_forward_impl.1} parent=5 // pred_fallthru
      _
  $region6: #{_generator_forward_impl.1} parent=0 // loop_footer
    %s15 = sadd.s32 1, %s11
  $region7: #{_generator_forward_impl.1} parent=0 // loop_footer_branch
    %10 = sbr.rel target = $region3
  $region8: #{_generator_forward_impl.1} parent=0 // loop_exit
    _

</llo_original>
